<compile_context>
chip_gen: v5e
topology: v5e:2x2
jax: 0.10.0
libtpu: 0.0.40
codegen_flags: <defaults>
</compile_context>

<pallas_src>
import functools

import jax
import jax.numpy as jnp
import numpy as np
from jax import lax
from jax.experimental import pallas as pl
from jax.experimental.pallas import tpu as pltpu


# ----------------------------------------------------------------------------
# small helpers
# ----------------------------------------------------------------------------
def _round_up(x, m):
    return (x + m - 1) // m * m


def _conv_out(n, k, s):
    return (n - k) // s + 1


def _pad_axis(x, target, axis):
    pad = target - x.shape[axis]
    if pad == 0:
        return x
    widths = [(0, 0)] * x.ndim
    widths[axis] = (0, pad)
    return jnp.pad(x, widths)


# ----------------------------------------------------------------------------
# Fused Pallas kernel: 4 GEMMs (conv1, conv2, fc1, fc2), biases + ReLUs fused,
# bf16 MXU operands with f32 accumulation.
# ----------------------------------------------------------------------------
def _dqn_fused_kernel(p1g_ref, xo_ref, w1_ref, w2_ref, wfc1_ref, wfc2_ref, b_ref,
                      o_ref, p2_buf, fc1_buf, *, dims):
    f32, bf16 = jnp.float32, jnp.bfloat16
    Q, OC1, OC2 = dims["Q"], dims["OC1"], dims["OC2"]
    KK2, OTH = dims["KK2"], dims["other_dim"]
    HID, NP = dims["HID"], dims["NP"]
    B = xo_ref.shape[0]
    M2 = B * Q                                           # conv2 output rows (b, q)

    # --- conv1: ONE GEMM.  Patch row p*M2 + (b*Q + q) is the conv1 input patch that
    #     feeds conv2 tap p at output position (b, q); every row is real data.
    g = jnp.dot(p1g_ref[...], w1_ref[...], preferred_element_type=f32)  # [KK2*M2, OC1]
    g = jnp.maximum(g + b_ref[0:1, 0:OC1], 0.0)

    # --- conv2: scatter the KK2 tap blocks into a lane-concatenated patch matrix
    #     (VMEM scratch, static masked stores) and contract ALL taps in ONE GEMM
    #     (K = KK2*OC1 = 256; accumulation stays on the MXU).
    for p in range(KK2):
        p2_buf[:, p * OC1:(p + 1) * OC1] = g[p * M2:(p + 1) * M2, :]
    h2 = jnp.dot(p2_buf[...].astype(bf16), w2_ref[...],
                 preferred_element_type=f32)                            # [M2, OC2]
    h2 = jnp.maximum(h2 + b_ref[1:2, 0:OC2], 0.0)

    # --- fc1 input: fold PyTorch's NCHW flatten + concat((x_other, conv)) into one
    #     row per batch element (the matching feature permutation was applied to the
    #     fc1 weight rows at parameter-load time).
    fc1_buf[...] = jnp.zeros_like(fc1_buf)
    fc1_buf[:, Q * OC2:Q * OC2 + OTH] = xo_ref[...]
    for b in range(B):
        for q in range(Q):
            fc1_buf[b:b + 1, q * OC2:(q + 1) * OC2] = h2[b * Q + q:b * Q + q + 1, :]

    # --- fc1 + fc2: two GEMMs, bias + ReLU fused; lane-dense padded output store.
    h3 = jnp.dot(fc1_buf[...].astype(bf16), wfc1_ref[...],
                 preferred_element_type=f32)                            # [B, HID]
    h3 = jnp.maximum(h3 + b_ref[2:3, 0:HID], 0.0).astype(bf16)
    out = jnp.dot(h3, wfc2_ref[...], preferred_element_type=f32) + b_ref[3:4, 0:NP]
    o_ref[...] = out.astype(o_ref.dtype)


# ----------------------------------------------------------------------------
# One-time parameter preprocessing: reshape conv weights to GEMM operands (UNPADDED),
# permute fc1 rows to reproduce torch's NCHW flatten + concat order, merge biases.
# ----------------------------------------------------------------------------
def prepare_params(params, frame_dim, frame_channels, other_dim, output_dim):
    H, W = frame_dim
    K1H, K1W, S1 = 8, 8, 4
    K2H, K2W, S2 = 4, 4, 2
    OC1, OC2 = 16, 32
    OH1, OW1 = _conv_out(H, K1H, S1), _conv_out(W, K1W, S1)
    OH2, OW2 = _conv_out(OH1, K2H, S2), _conv_out(OW1, K2W, S2)
    Q = OH2 * OW2
    KK2 = K2H * K2W
    K1 = frame_channels * K1H * K1W
    HID = params["fc1_w"].shape[1]
    NP = _round_up(output_dim, 128)

    bf16, f32 = jnp.bfloat16, jnp.float32

    # conv1 weight -> [K1, OC1]; patch columns ordered (c, kh1, kw1) = torch OIHW flatten.
    w1 = params["conv1_w"].reshape(OC1, K1).T.astype(bf16)

    # conv2 weight -> [KK2*OC1, OC2], rows ordered (kh2, kw2, c1) = (tap p, c1) to match
    # the lane-concatenated patch matrix assembled inside the kernel.
    w2 = jnp.transpose(params["conv2_w"], (2, 3, 1, 0)).reshape(KK2 * OC1, OC2).astype(bf16)

    # fc1 weight: permute rows once so the kernel feature order [conv (q, c2) blocks,
    # then the "other" features] reproduces torch's NCHW .view + concat((x_other, conv)).
    fc1_w = params["fc1_w"]
    conv_rows = other_dim + (np.arange(Q)[:, None] + Q * np.arange(OC2)[None, :]).reshape(-1)
    wfc1 = jnp.concatenate([fc1_w[conv_rows], fc1_w[:other_dim]], axis=0).astype(bf16)

    # fc2 weight: only the output (lane) dim is padded, for a lane-dense final store.
    wfc2 = _pad_axis(params["fc2_w"], NP, 1).astype(bf16)

    # all four biases merged into one small f32 operand (row 0..3 = conv1/conv2/fc1/fc2).
    BW = max(HID, NP, OC1, OC2)
    biases = jnp.zeros((4, BW), f32)
    biases = biases.at[0, :OC1].set(params["conv1_b"])
    biases = biases.at[1, :OC2].set(params["conv2_b"])
    biases = biases.at[2, :HID].set(params["fc1_b"])
    biases = biases.at[3, :output_dim].set(params["fc2_b"])

    prep = dict(w1=w1, w2=w2, wfc1=wfc1, wfc2=wfc2, biases=biases)
    dims = dict(H=H, W=W, C=frame_channels, other_dim=other_dim, output_dim=output_dim,
                OH1=OH1, OW1=OW1, OH2=OH2, OW2=OW2, Q=Q, KK2=KK2,
                K1H=K1H, K1W=K1W, S1=S1, K2H=K2H, K2W=K2W, S2=S2,
                OC1=OC1, OC2=OC2, HID=HID, K1=K1, NP=NP)
    return prep, dims


# ----------------------------------------------------------------------------
# Gather-free conv1 im2col with conv2's im2col row-gather pre-composed.
# Row p*(B*Q) + (b*Q + q) is the conv1 input patch feeding conv2 tap p at output (b, q).
# ----------------------------------------------------------------------------
def _conv_patches(x_frame, dims):
    B = x_frame.shape[0]
    C, K1 = dims["C"], dims["K1"]
    K1H, K1W, S1 = dims["K1H"], dims["K1W"], dims["S1"]
    K2H, K2W, S2 = dims["K2H"], dims["K2W"], dims["S2"]
    OH1, OW1, OH2, OW2 = dims["OH1"], dims["OW1"], dims["OH2"], dims["OW2"]

    # conv1 im2col: K1H*K1W static strided slices (no advanced indexing).
    taps = []
    for ih in range(K1H):
        for iw in range(K1W):
            taps.append(lax.slice(
                x_frame, (0, 0, ih, iw),
                (B, C, ih + (OH1 - 1) * S1 + 1, iw + (OW1 - 1) * S1 + 1),
                (1, 1, S1, S1)))                       # [B, C, OH1, OW1]
    pat = jnp.stack(taps, axis=2)                      # [B, C, K1H*K1W, OH1, OW1]
    pat = pat.reshape(B, K1, OH1, OW1)                 # feature = c*K1H*K1W + ih*K1W + iw
    pat = jnp.transpose(pat, (0, 2, 3, 1))             # [B, OH1, OW1, K1]

    # compose conv2's im2col: one row block of conv1 patches per conv2 tap (kh2, kw2).
    blocks = []
    for kh2 in range(K2H):
        for kw2 in range(K2W):
            blk = lax.slice(pat, (0, kh2, kw2, 0),
                            (B, kh2 + (OH2 - 1) * S2 + 1, kw2 + (OW2 - 1) * S2 + 1, K1),
                            (1, S2, S2, 1))            # [B, OH2, OW2, K1]
            blocks.append(blk.reshape(B * OH2 * OW2, K1))
    return jnp.concatenate(blocks, axis=0)             # [KK2*B*Q, K1]


# ----------------------------------------------------------------------------
# Forward pass: thin XLA glue + one pallas_call (no grid, VMEM-resident operands).
# ----------------------------------------------------------------------------
def dqn_forward(x, prep, *, dims):
    B = x.shape[0]
    C, H, W = dims["C"], dims["H"], dims["W"]
    other_dim, output_dim = dims["other_dim"], dims["output_dim"]
    Q, KK2, OC1, OC2 = dims["Q"], dims["KK2"], dims["OC1"], dims["OC2"]
    HID, NP, K1 = dims["HID"], dims["NP"], dims["K1"]
    M2 = B * Q

    x_other = x[:, :other_dim]                                   # [B, 8] f32
    x_frame = x[:, other_dim:].reshape(B, C, H, W)
    p1g = _conv_patches(x_frame, dims).astype(jnp.bfloat16)      # [KK2*M2, K1]

    operands = (p1g, x_other, prep["w1"], prep["w2"], prep["wfc1"], prep["wfc2"],
                prep["biases"])

    # real (unpadded) flops / bytes -- advisory only.
    flops = 2 * (KK2 * M2 * K1 * OC1 + M2 * KK2 * OC1 * OC2
                 + B * (Q * OC2 + other_dim) * HID + B * HID * NP)
    bytes_accessed = int(sum(int(np.prod(o.shape)) * o.dtype.itemsize for o in operands)
                         + B * NP * 4)

    vmem = pl.BlockSpec(memory_space=pltpu.MemorySpace.VMEM)
    out = pl.pallas_call(
        functools.partial(_dqn_fused_kernel, dims=dims),
        out_shape=jax.ShapeDtypeStruct((B, NP), jnp.float32),
        in_specs=[vmem] * len(operands),
        out_specs=vmem,
        scratch_shapes=[
            pltpu.VMEM((M2, KK2 * OC1), jnp.float32),            # conv2 patch matrix
            pltpu.VMEM((B, Q * OC2 + other_dim), jnp.float32),   # fc1 input rows
        ],
        cost_estimate=pl.CostEstimate(flops=flops, transcendentals=0,
                                      bytes_accessed=bytes_accessed),
    )(*operands)

    return out[:, :output_dim]


# ----------------------------------------------------------------------------
# Plain-JAX f32 reference (mirrors the PyTorch module exactly).
# ----------------------------------------------------------------------------
def dqn_forward_ref(x, params, frame_dim, frame_channels, other_dim):
    B = x.shape[0]
    x_other = x[:, :other_dim]
    xf = x[:, other_dim:].reshape(B, frame_channels, frame_dim[0], frame_dim[1])

    def conv(h, w, b, s):
        o = lax.conv_general_dilated(h, w, (s, s), "VALID",
                                     dimension_numbers=("NCHW", "OIHW", "NCHW"))
        return jnp.maximum(o + b[None, :, None, None], 0.0)

    h = conv(xf, params["conv1_w"], params["conv1_b"], 4)
    h = conv(h, params["conv2_w"], params["conv2_b"], 2)
    h = h.reshape(B, -1)
    h = jnp.concatenate([x_other, h], axis=1)
    h = jnp.maximum(h @ params["fc1_w"] + params["fc1_b"], 0.0)
    return h @ params["fc2_w"] + params["fc2_b"]


def init_params(key, frame_dim, frame_channels, other_dim, output_dim):
    """Deterministic synthetic parameters matching the nn.Module shapes.
    fc weights are stored [in, out] (transposed from torch's [out, in]); forward is h @ W."""
    ks = jax.random.split(key, 8)
    oh1, ow1 = _conv_out(frame_dim[0], 8, 4), _conv_out(frame_dim[1], 8, 4)
    oh2, ow2 = _conv_out(oh1, 4, 2), _conv_out(ow1, 4, 2)
    fc1_in = 32 * oh2 * ow2 + other_dim

    def u(k, shape, fan_in):
        bound = 1.0 / np.sqrt(fan_in)
        return jax.random.uniform(k, shape, jnp.float32, -bound, bound)

    f1 = frame_channels * 8 * 8
    f2 = 16 * 4 * 4
    return {
        "conv1_w": u(ks[0], (16, frame_channels, 8, 8), f1),
        "conv1_b": u(ks[1], (16,), f1),
        "conv2_w": u(ks[2], (32, 16, 4, 4), f2),
        "conv2_b": u(ks[3], (32,), f2),
        "fc1_w":   u(ks[4], (fc1_in, 256), fc1_in),
        "fc1_b":   u(ks[5], (256,), fc1_in),
        "fc2_w":   u(ks[6], (256, output_dim), 256),
        "fc2_b":   u(ks[7], (output_dim,), 256),
    }


if __name__ == "__main__":
    # conv1 (k8,s4) then conv2 (k4,s2) requires H, W >= 20.
    frame_dim = (32, 32)
    frame_channels = 4
    other_dim = 8
    output_dim = 6
    batch = 2

    key = jax.random.PRNGKey(0)
    kp, kx = jax.random.split(key)
    params = init_params(kp, frame_dim, frame_channels, other_dim, output_dim)

    in_dim = other_dim + frame_channels * frame_dim[0] * frame_dim[1]
    x = jax.random.normal(kx, (batch, in_dim), jnp.float32)

    prep, dims = prepare_params(params, frame_dim, frame_channels, other_dim, output_dim)
    fwd = jax.jit(functools.partial(dqn_forward, dims=dims))

    out = jax.block_until_ready(fwd(x, prep))

    ref = dqn_forward_ref(x, params, frame_dim, frame_channels, other_dim)
    # bf16 MXU operands with f32 accumulation -> loose tolerance vs the f32 reference.
    np.testing.assert_allclose(np.asarray(out), np.asarray(ref), rtol=5e-2, atol=5e-2)

    assert out.shape == (batch, output_dim)
    print("KERNEL_OK")
</pallas_src>

<mosaic_0001>
module attributes {stable_mosaic.version = 11 : i64} {
  func.func @_dqn_fused_kernel(%arg0: memref<128x256xbf16, #tpu.memory_space<vmem>>, %arg1: memref<2x8xf32, #tpu.memory_space<vmem>>, %arg2: memref<256x16xbf16, #tpu.memory_space<vmem>>, %arg3: memref<256x32xbf16, #tpu.memory_space<vmem>>, %arg4: memref<136x256xbf16, #tpu.memory_space<vmem>>, %arg5: memref<256x128xbf16, #tpu.memory_space<vmem>>, %arg6: memref<4x256xf32, #tpu.memory_space<vmem>>, %arg7: memref<2x128xf32, #tpu.memory_space<vmem>>, %arg8: memref<8x256xf32, #tpu.memory_space<vmem>>, %arg9: memref<2x136xf32, #tpu.memory_space<vmem>>) attributes {dimension_semantics = [], scalar_prefetch = 0 : i64, scratch_operands = 2 : i64, tpu.core_type = #tpu.core_type<tc>} {
    %c0 = arith.constant 0 : index
    %c0_0 = arith.constant 0 : index
    %0 = vector.load %arg0[%c0, %c0_0] : memref<128x256xbf16, #tpu.memory_space<vmem>>, vector<128x256xbf16>
    %c0_1 = arith.constant 0 : index
    %c0_2 = arith.constant 0 : index
    %1 = vector.load %arg2[%c0_1, %c0_2] : memref<256x16xbf16, #tpu.memory_space<vmem>>, vector<256x16xbf16>
    %cst = arith.constant dense<0.000000e+00> : vector<128x16xf32>
    %2 = tpu.matmul %0, %1, %cst {dimension_numbers = #tpu.dot_dimension_numbers<[1], [0], [0], [1], [0, 0, 1, 1], [], []>} : vector<128x256xbf16>, vector<256x16xbf16>, vector<128x16xf32> -> vector<128x16xf32>
    %c0_3 = arith.constant 0 : index
    %c0_4 = arith.constant 0 : index
    %3 = vector.load %arg6[%c0_3, %c0_4] : memref<4x256xf32, #tpu.memory_space<vmem>>, vector<1x16xf32>
    %4 = vector.broadcast %3 : vector<1x16xf32> to vector<128x16xf32>
    %5 = arith.addf %2, %4 : vector<128x16xf32>
    %cst_5 = arith.constant 0.000000e+00 : f32
    %6 = vector.broadcast %cst_5 : f32 to vector<128x16xf32>
    %7 = arith.maximumf %5, %6 : vector<128x16xf32>
    %8 = vector.extract_strided_slice %7 {offsets = [0, 0], sizes = [8, 16], strides = [1, 1]} : vector<128x16xf32> to vector<8x16xf32>
    %c0_6 = arith.constant 0 : index
    %c0_7 = arith.constant 0 : index
    %9 = vector.load %arg8[%c0_6, %c0_7] : memref<8x256xf32, #tpu.memory_space<vmem>>, vector<8x16xf32>
    tpu.vector_store %arg8[%c0_6, %c0_7], %8 {strides = array<i32>} : memref<8x256xf32, #tpu.memory_space<vmem>>, vector<8x16xf32>,
    %10 = vector.extract_strided_slice %7 {offsets = [8, 0], sizes = [8, 16], strides = [1, 1]} : vector<128x16xf32> to vector<8x16xf32>
    %c0_8 = arith.constant 0 : index
    %c16 = arith.constant 16 : index
    %11 = vector.load %arg8[%c0_8, %c16] : memref<8x256xf32, #tpu.memory_space<vmem>>, vector<8x16xf32>
    tpu.vector_store %arg8[%c0_8, %c16], %10 {strides = array<i32>} : memref<8x256xf32, #tpu.memory_space<vmem>>, vector<8x16xf32>,
    %12 = vector.extract_strided_slice %7 {offsets = [16, 0], sizes = [8, 16], strides = [1, 1]} : vector<128x16xf32> to vector<8x16xf32>
    %c0_9 = arith.constant 0 : index
    %c32 = arith.constant 32 : index
    %13 = vector.load %arg8[%c0_9, %c32] : memref<8x256xf32, #tpu.memory_space<vmem>>, vector<8x16xf32>
    tpu.vector_store %arg8[%c0_9, %c32], %12 {strides = array<i32>} : memref<8x256xf32, #tpu.memory_space<vmem>>, vector<8x16xf32>,
    %14 = vector.extract_strided_slice %7 {offsets = [24, 0], sizes = [8, 16], strides = [1, 1]} : vector<128x16xf32> to vector<8x16xf32>
    %c0_10 = arith.constant 0 : index
    %c48 = arith.constant 48 : index
    %15 = vector.load %arg8[%c0_10, %c48] : memref<8x256xf32, #tpu.memory_space<vmem>>, vector<8x16xf32>
    tpu.vector_store %arg8[%c0_10, %c48], %14 {strides = array<i32>} : memref<8x256xf32, #tpu.memory_space<vmem>>, vector<8x16xf32>,
    %16 = vector.extract_strided_slice %7 {offsets = [32, 0], sizes = [8, 16], strides = [1, 1]} : vector<128x16xf32> to vector<8x16xf32>
    %c0_11 = arith.constant 0 : index
    %c64 = arith.constant 64 : index
    %17 = vector.load %arg8[%c0_11, %c64] : memref<8x256xf32, #tpu.memory_space<vmem>>, vector<8x16xf32>
    tpu.vector_store %arg8[%c0_11, %c64], %16 {strides = array<i32>} : memref<8x256xf32, #tpu.memory_space<vmem>>, vector<8x16xf32>,
    %18 = vector.extract_strided_slice %7 {offsets = [40, 0], sizes = [8, 16], strides = [1, 1]} : vector<128x16xf32> to vector<8x16xf32>
    %c0_12 = arith.constant 0 : index
    %c80 = arith.constant 80 : index
    %19 = vector.load %arg8[%c0_12, %c80] : memref<8x256xf32, #tpu.memory_space<vmem>>, vector<8x16xf32>
    tpu.vector_store %arg8[%c0_12, %c80], %18 {strides = array<i32>} : memref<8x256xf32, #tpu.memory_space<vmem>>, vector<8x16xf32>,
    %20 = vector.extract_strided_slice %7 {offsets = [48, 0], sizes = [8, 16], strides = [1, 1]} : vector<128x16xf32> to vector<8x16xf32>
    %c0_13 = arith.constant 0 : index
    %c96 = arith.constant 96 : index
    %21 = vector.load %arg8[%c0_13, %c96] : memref<8x256xf32, #tpu.memory_space<vmem>>, vector<8x16xf32>
    tpu.vector_store %arg8[%c0_13, %c96], %20 {strides = array<i32>} : memref<8x256xf32, #tpu.memory_space<vmem>>, vector<8x16xf32>,
    %22 = vector.extract_strided_slice %7 {offsets = [56, 0], sizes = [8, 16], strides = [1, 1]} : vector<128x16xf32> to vector<8x16xf32>
    %c0_14 = arith.constant 0 : index
    %c112 = arith.constant 112 : index
    %23 = vector.load %arg8[%c0_14, %c112] : memref<8x256xf32, #tpu.memory_space<vmem>>, vector<8x16xf32>
    tpu.vector_store %arg8[%c0_14, %c112], %22 {strides = array<i32>} : memref<8x256xf32, #tpu.memory_space<vmem>>, vector<8x16xf32>,
    %24 = vector.extract_strided_slice %7 {offsets = [64, 0], sizes = [8, 16], strides = [1, 1]} : vector<128x16xf32> to vector<8x16xf32>
    %c0_15 = arith.constant 0 : index
    %c128 = arith.constant 128 : index
    %25 = vector.load %arg8[%c0_15, %c128] : memref<8x256xf32, #tpu.memory_space<vmem>>, vector<8x16xf32>
    tpu.vector_store %arg8[%c0_15, %c128], %24 {strides = array<i32>} : memref<8x256xf32, #tpu.memory_space<vmem>>, vector<8x16xf32>,
    %26 = vector.extract_strided_slice %7 {offsets = [72, 0], sizes = [8, 16], strides = [1, 1]} : vector<128x16xf32> to vector<8x16xf32>
    %c0_16 = arith.constant 0 : index
    %c144 = arith.constant 144 : index
    %27 = vector.load %arg8[%c0_16, %c144] : memref<8x256xf32, #tpu.memory_space<vmem>>, vector<8x16xf32>
    tpu.vector_store %arg8[%c0_16, %c144], %26 {strides = array<i32>} : memref<8x256xf32, #tpu.memory_space<vmem>>, vector<8x16xf32>,
    %28 = vector.extract_strided_slice %7 {offsets = [80, 0], sizes = [8, 16], strides = [1, 1]} : vector<128x16xf32> to vector<8x16xf32>
    %c0_17 = arith.constant 0 : index
    %c160 = arith.constant 160 : index
    %29 = vector.load %arg8[%c0_17, %c160] : memref<8x256xf32, #tpu.memory_space<vmem>>, vector<8x16xf32>
    tpu.vector_store %arg8[%c0_17, %c160], %28 {strides = array<i32>} : memref<8x256xf32, #tpu.memory_space<vmem>>, vector<8x16xf32>,
    %30 = vector.extract_strided_slice %7 {offsets = [88, 0], sizes = [8, 16], strides = [1, 1]} : vector<128x16xf32> to vector<8x16xf32>
    %c0_18 = arith.constant 0 : index
    %c176 = arith.constant 176 : index
    %31 = vector.load %arg8[%c0_18, %c176] : memref<8x256xf32, #tpu.memory_space<vmem>>, vector<8x16xf32>
    tpu.vector_store %arg8[%c0_18, %c176], %30 {strides = array<i32>} : memref<8x256xf32, #tpu.memory_space<vmem>>, vector<8x16xf32>,
    %32 = vector.extract_strided_slice %7 {offsets = [96, 0], sizes = [8, 16], strides = [1, 1]} : vector<128x16xf32> to vector<8x16xf32>
    %c0_19 = arith.constant 0 : index
    %c192 = arith.constant 192 : index
    %33 = vector.load %arg8[%c0_19, %c192] : memref<8x256xf32, #tpu.memory_space<vmem>>, vector<8x16xf32>
    tpu.vector_store %arg8[%c0_19, %c192], %32 {strides = array<i32>} : memref<8x256xf32, #tpu.memory_space<vmem>>, vector<8x16xf32>,
    %34 = vector.extract_strided_slice %7 {offsets = [104, 0], sizes = [8, 16], strides = [1, 1]} : vector<128x16xf32> to vector<8x16xf32>
    %c0_20 = arith.constant 0 : index
    %c208 = arith.constant 208 : index
    %35 = vector.load %arg8[%c0_20, %c208] : memref<8x256xf32, #tpu.memory_space<vmem>>, vector<8x16xf32>
    tpu.vector_store %arg8[%c0_20, %c208], %34 {strides = array<i32>} : memref<8x256xf32, #tpu.memory_space<vmem>>, vector<8x16xf32>,
    %36 = vector.extract_strided_slice %7 {offsets = [112, 0], sizes = [8, 16], strides = [1, 1]} : vector<128x16xf32> to vector<8x16xf32>
    %c0_21 = arith.constant 0 : index
    %c224 = arith.constant 224 : index
    %37 = vector.load %arg8[%c0_21, %c224] : memref<8x256xf32, #tpu.memory_space<vmem>>, vector<8x16xf32>
    tpu.vector_store %arg8[%c0_21, %c224], %36 {strides = array<i32>} : memref<8x256xf32, #tpu.memory_space<vmem>>, vector<8x16xf32>,
    %38 = vector.extract_strided_slice %7 {offsets = [120, 0], sizes = [8, 16], strides = [1, 1]} : vector<128x16xf32> to vector<8x16xf32>
    %c0_22 = arith.constant 0 : index
    %c240 = arith.constant 240 : index
    %39 = vector.load %arg8[%c0_22, %c240] : memref<8x256xf32, #tpu.memory_space<vmem>>, vector<8x16xf32>
    tpu.vector_store %arg8[%c0_22, %c240], %38 {strides = array<i32>} : memref<8x256xf32, #tpu.memory_space<vmem>>, vector<8x16xf32>,
    %c0_23 = arith.constant 0 : index
    %c0_24 = arith.constant 0 : index
    %40 = vector.load %arg8[%c0_23, %c0_24] : memref<8x256xf32, #tpu.memory_space<vmem>>, vector<8x256xf32>
    %41 = arith.truncf %40 : vector<8x256xf32> to vector<8x256xbf16>
    %c0_25 = arith.constant 0 : index
    %c0_26 = arith.constant 0 : index
    %42 = vector.load %arg3[%c0_25, %c0_26] : memref<256x32xbf16, #tpu.memory_space<vmem>>, vector<256x32xbf16>
    %cst_27 = arith.constant dense<0.000000e+00> : vector<8x32xf32>
    %43 = tpu.matmul %41, %42, %cst_27 {dimension_numbers = #tpu.dot_dimension_numbers<[1], [0], [0], [1], [0, 0, 1, 1], [], []>} : vector<8x256xbf16>, vector<256x32xbf16>, vector<8x32xf32> -> vector<8x32xf32>
    %c1 = arith.constant 1 : index
    %c0_28 = arith.constant 0 : index
    %44 = vector.load %arg6[%c1, %c0_28] : memref<4x256xf32, #tpu.memory_space<vmem>>, vector<1x32xf32>
    %45 = vector.broadcast %44 : vector<1x32xf32> to vector<8x32xf32>
    %46 = arith.addf %43, %45 : vector<8x32xf32>
    %cst_29 = arith.constant 0.000000e+00 : f32
    %47 = vector.broadcast %cst_29 : f32 to vector<8x32xf32>
    %48 = arith.maximumf %46, %47 : vector<8x32xf32>
    %cst_30 = arith.constant 0.000000e+00 : f32
    %49 = vector.broadcast %cst_30 : f32 to vector<2x136xf32>
    %c0_31 = arith.constant 0 : index
    %c0_32 = arith.constant 0 : index
    %50 = vector.load %arg9[%c0_31, %c0_32] : memref<2x136xf32, #tpu.memory_space<vmem>>, vector<2x136xf32>
    tpu.vector_store %arg9[%c0_31, %c0_32], %49 {strides = array<i32>} : memref<2x136xf32, #tpu.memory_space<vmem>>, vector<2x136xf32>,
    %c0_33 = arith.constant 0 : index
    %c0_34 = arith.constant 0 : index
    %51 = vector.load %arg1[%c0_33, %c0_34] : memref<2x8xf32, #tpu.memory_space<vmem>>, vector<2x8xf32>
    %c0_35 = arith.constant 0 : index
    %c128_36 = arith.constant 128 : index
    %52 = vector.load %arg9[%c0_35, %c128_36] : memref<2x136xf32, #tpu.memory_space<vmem>>, vector<2x8xf32>
    tpu.vector_store %arg9[%c0_35, %c128_36], %51 {strides = array<i32>} : memref<2x136xf32, #tpu.memory_space<vmem>>, vector<2x8xf32>,
    %53 = vector.extract_strided_slice %48 {offsets = [0, 0], sizes = [1, 32], strides = [1, 1]} : vector<8x32xf32> to vector<1x32xf32>
    %c0_37 = arith.constant 0 : index
    %c0_38 = arith.constant 0 : index
    %54 = vector.load %arg9[%c0_37, %c0_38] : memref<2x136xf32, #tpu.memory_space<vmem>>, vector<1x32xf32>
    tpu.vector_store %arg9[%c0_37, %c0_38], %53 {strides = array<i32>} : memref<2x136xf32, #tpu.memory_space<vmem>>, vector<1x32xf32>,
    %55 = vector.extract_strided_slice %48 {offsets = [1, 0], sizes = [1, 32], strides = [1, 1]} : vector<8x32xf32> to vector<1x32xf32>
    %c0_39 = arith.constant 0 : index
    %c32_40 = arith.constant 32 : index
    %56 = vector.load %arg9[%c0_39, %c32_40] : memref<2x136xf32, #tpu.memory_space<vmem>>, vector<1x32xf32>
    tpu.vector_store %arg9[%c0_39, %c32_40], %55 {strides = array<i32>} : memref<2x136xf32, #tpu.memory_space<vmem>>, vector<1x32xf32>,
    %57 = vector.extract_strided_slice %48 {offsets = [2, 0], sizes = [1, 32], strides = [1, 1]} : vector<8x32xf32> to vector<1x32xf32>
    %c0_41 = arith.constant 0 : index
    %c64_42 = arith.constant 64 : index
    %58 = vector.load %arg9[%c0_41, %c64_42] : memref<2x136xf32, #tpu.memory_space<vmem>>, vector<1x32xf32>
    tpu.vector_store %arg9[%c0_41, %c64_42], %57 {strides = array<i32>} : memref<2x136xf32, #tpu.memory_space<vmem>>, vector<1x32xf32>,
    %59 = vector.extract_strided_slice %48 {offsets = [3, 0], sizes = [1, 32], strides = [1, 1]} : vector<8x32xf32> to vector<1x32xf32>
    %c0_43 = arith.constant 0 : index
    %c96_44 = arith.constant 96 : index
    %60 = vector.load %arg9[%c0_43, %c96_44] : memref<2x136xf32, #tpu.memory_space<vmem>>, vector<1x32xf32>
    tpu.vector_store %arg9[%c0_43, %c96_44], %59 {strides = array<i32>} : memref<2x136xf32, #tpu.memory_space<vmem>>, vector<1x32xf32>,
    %61 = vector.extract_strided_slice %48 {offsets = [4, 0], sizes = [1, 32], strides = [1, 1]} : vector<8x32xf32> to vector<1x32xf32>
    %c1_45 = arith.constant 1 : index
    %c0_46 = arith.constant 0 : index
    %62 = vector.load %arg9[%c1_45, %c0_46] : memref<2x136xf32, #tpu.memory_space<vmem>>, vector<1x32xf32>
    tpu.vector_store %arg9[%c1_45, %c0_46], %61 {strides = array<i32>} : memref<2x136xf32, #tpu.memory_space<vmem>>, vector<1x32xf32>,
    %63 = vector.extract_strided_slice %48 {offsets = [5, 0], sizes = [1, 32], strides = [1, 1]} : vector<8x32xf32> to vector<1x32xf32>
    %c1_47 = arith.constant 1 : index
    %c32_48 = arith.constant 32 : index
    %64 = vector.load %arg9[%c1_47, %c32_48] : memref<2x136xf32, #tpu.memory_space<vmem>>, vector<1x32xf32>
    tpu.vector_store %arg9[%c1_47, %c32_48], %63 {strides = array<i32>} : memref<2x136xf32, #tpu.memory_space<vmem>>, vector<1x32xf32>,
    %65 = vector.extract_strided_slice %48 {offsets = [6, 0], sizes = [1, 32], strides = [1, 1]} : vector<8x32xf32> to vector<1x32xf32>
    %c1_49 = arith.constant 1 : index
    %c64_50 = arith.constant 64 : index
    %66 = vector.load %arg9[%c1_49, %c64_50] : memref<2x136xf32, #tpu.memory_space<vmem>>, vector<1x32xf32>
    tpu.vector_store %arg9[%c1_49, %c64_50], %65 {strides = array<i32>} : memref<2x136xf32, #tpu.memory_space<vmem>>, vector<1x32xf32>,
    %67 = vector.extract_strided_slice %48 {offsets = [7, 0], sizes = [1, 32], strides = [1, 1]} : vector<8x32xf32> to vector<1x32xf32>
    %c1_51 = arith.constant 1 : index
    %c96_52 = arith.constant 96 : index
    %68 = vector.load %arg9[%c1_51, %c96_52] : memref<2x136xf32, #tpu.memory_space<vmem>>, vector<1x32xf32>
    tpu.vector_store %arg9[%c1_51, %c96_52], %67 {strides = array<i32>} : memref<2x136xf32, #tpu.memory_space<vmem>>, vector<1x32xf32>,
    %c0_53 = arith.constant 0 : index
    %c0_54 = arith.constant 0 : index
    %69 = vector.load %arg9[%c0_53, %c0_54] : memref<2x136xf32, #tpu.memory_space<vmem>>, vector<2x136xf32>
    %70 = arith.truncf %69 : vector<2x136xf32> to vector<2x136xbf16>
    %c0_55 = arith.constant 0 : index
    %c0_56 = arith.constant 0 : index
    %71 = vector.load %arg4[%c0_55, %c0_56] : memref<136x256xbf16, #tpu.memory_space<vmem>>, vector<136x256xbf16>
    %cst_57 = arith.constant dense<0.000000e+00> : vector<2x256xf32>
    %72 = tpu.matmul %70, %71, %cst_57 {dimension_numbers = #tpu.dot_dimension_numbers<[1], [0], [0], [1], [0, 0, 1, 1], [], []>} : vector<2x136xbf16>, vector<136x256xbf16>, vector<2x256xf32> -> vector<2x256xf32>
    %c2 = arith.constant 2 : index
    %c0_58 = arith.constant 0 : index
    %73 = vector.load %arg6[%c2, %c0_58] : memref<4x256xf32, #tpu.memory_space<vmem>>, vector<1x256xf32>
    %74 = vector.broadcast %73 : vector<1x256xf32> to vector<2x256xf32>
    %75 = arith.addf %72, %74 : vector<2x256xf32>
    %cst_59 = arith.constant 0.000000e+00 : f32
    %76 = vector.broadcast %cst_59 : f32 to vector<2x256xf32>
    %77 = arith.maximumf %75, %76 : vector<2x256xf32>
    %78 = arith.truncf %77 : vector<2x256xf32> to vector<2x256xbf16>
    %c0_60 = arith.constant 0 : index
    %c0_61 = arith.constant 0 : index
    %79 = vector.load %arg5[%c0_60, %c0_61] : memref<256x128xbf16, #tpu.memory_space<vmem>>, vector<256x128xbf16>
    %cst_62 = arith.constant dense<0.000000e+00> : vector<2x128xf32>
    %80 = tpu.matmul %78, %79, %cst_62 {dimension_numbers = #tpu.dot_dimension_numbers<[1], [0], [0], [1], [0, 0, 1, 1], [], []>} : vector<2x256xbf16>, vector<256x128xbf16>, vector<2x128xf32> -> vector<2x128xf32>
    %c3 = arith.constant 3 : index
    %c0_63 = arith.constant 0 : index
    %81 = vector.load %arg6[%c3, %c0_63] : memref<4x256xf32, #tpu.memory_space<vmem>>, vector<1x128xf32>
    %82 = vector.broadcast %81 : vector<1x128xf32> to vector<2x128xf32>
    %83 = arith.addf %80, %82 : vector<2x128xf32>
    %c0_64 = arith.constant 0 : index
    %c0_65 = arith.constant 0 : index
    %84 = vector.load %arg7[%c0_64, %c0_65] : memref<2x128xf32, #tpu.memory_space<vmem>>, vector<2x128xf32>
    tpu.vector_store %arg7[%c0_64, %c0_65], %83 {strides = array<i32>} : memref<2x128xf32, #tpu.memory_space<vmem>>, vector<2x128xf32>,
    return
  }
}

</mosaic_0001>

<llo_original>
// kernel: dqn_forward.1
$region0: #{dqn_forward.1}
  #allocation0 [shape = 'u32[]', space=smem, size = 0x4, offset = 0x4, fixed_abs, tag = 'smem constant byte address 0x4 - core index']
  #allocation1 [shape = 'u32[72,128]{1,0:T(1,128)}', space=vmem, size = 0x9000, scoped, tag = 'internal scratch']
  #allocation2 [shape = 'f32[8,256]{1,0:T(8,128)}', space=vmem, size = 0x2000, scoped, tag = 'scratch operand']
  #allocation3 [shape = 'f32[2,136]{1,0:T(2,128)}', space=vmem, size = 0x800, scoped, tag = 'scratch operand']
  %s0 = inlined_call_operand.vmem [shape: bf16[128,256], index: 0, kind: input, shape index: {}]
  %s1 = inlined_call_operand.vmem [shape: f32[2,8], index: 1, kind: input, shape index: {}]
  %s2 = inlined_call_operand.vmem [shape: bf16[256,16], index: 2, kind: input, shape index: {}]
  %s3 = inlined_call_operand.vmem [shape: bf16[256,32], index: 3, kind: input, shape index: {}]
  %s4 = inlined_call_operand.vmem [shape: bf16[136,256], index: 4, kind: input, shape index: {}]
  %s5 = inlined_call_operand.vmem [shape: bf16[256,128], index: 5, kind: input, shape index: {}]
  %s6 = inlined_call_operand.vmem [shape: f32[4,256], index: 6, kind: input, shape index: {}]
  %s7 = inlined_call_operand.hbm [shape: f32[2,128], index: 7, kind: output, shape index: {}]
  %s8 = sld [smem:[#allocation0]]
  $region38: #{dqn_forward.1} parent=0
    _
  %s10 = ssub.s32 1, %s8
  %s11 = scalar_select 0, %s10, %s8
  $region1: #{dqn_forward.1} parent=0
    #allocation4 [shape = 'u8[1024]{0}', space=vmem, size = 0x400, scoped, tag = 'output window, operand 0, single buffered']
    #allocation5 [shape = 's32[1]{0}', space=sflag, size = 0x4, scoped, tag = 'scoped memory for dqn_forward.1']
    %12 = vsyncpa [#allocation5], 0
    // Predicated region
    $region2: #{dqn_forward.1} parent=1 // pred_check
      _
    $region3: #{dqn_forward.1} parent=1 // pred_check_branch
      %14 = sbr.rel (0) target = $region5
    $region4: #{dqn_forward.1} parent=1 // pred_region
      _
    $region5: #{dqn_forward.1} parent=1 // pred_fallthru
      _
    // Predicated region
    $region6: #{dqn_forward.1} parent=1 // pred_check
      _
    $region7: #{dqn_forward.1} parent=1 // pred_check_branch
      %16 = sbr.rel (0) target = $region9
    $region8: #{dqn_forward.1} parent=1 // pred_region
      _
    $region9: #{dqn_forward.1} parent=1 // pred_fallthru
      _
    // Predicated region
    $region10: #{dqn_forward.1} parent=1 // pred_check
      _
    $region11: #{dqn_forward.1} parent=1 // pred_check_branch
      %18 = sbr.rel (0) target = $region13
    $region12: #{dqn_forward.1} parent=1 // pred_region
      _
    $region13: #{dqn_forward.1} parent=1 // pred_fallthru
      _
    // Predicated region
    $region14: #{dqn_forward.1} parent=1 // pred_check
      _
    $region15: #{dqn_forward.1} parent=1 // pred_check_branch
      %20 = sbr.rel (0) target = $region17
    $region16: #{dqn_forward.1} parent=1 // pred_region
      _
    $region17: #{dqn_forward.1} parent=1 // pred_fallthru
      _
    // Predicated region
    $region18: #{dqn_forward.1} parent=1 // pred_check
      _
    $region19: #{dqn_forward.1} parent=1 // pred_check_branch
      %22 = sbr.rel (0) target = $region21
    $region20: #{dqn_forward.1} parent=1 // pred_region
      _
    $region21: #{dqn_forward.1} parent=1 // pred_fallthru
      _
    // Predicated region
    $region22: #{dqn_forward.1} parent=1 // pred_check
      _
    $region23: #{dqn_forward.1} parent=1 // pred_check_branch
      %24 = sbr.rel (0) target = $region25
    $region24: #{dqn_forward.1} parent=1 // pred_region
      _
    $region25: #{dqn_forward.1} parent=1 // pred_fallthru
      _
    // Predicated region
    $region26: #{dqn_forward.1} parent=1 // pred_check
      _
    $region27: #{dqn_forward.1} parent=1 // pred_check_branch
      %26 = sbr.rel (0) target = $region29
    $region28: #{dqn_forward.1} parent=1 // pred_region
      _
    $region29: #{dqn_forward.1} parent=1 // pred_fallthru
      _
    %v28 = vld [vmem:[%s0] sm:$0xff]
    %v29 = vld [vmem:[%s0 + $0x8] sm:$0xff]
    %v30 = vld [vmem:[%s0 + $0x10] sm:$0xff]
    %v31 = vld [vmem:[%s0 + $0x18] sm:$0xff]
    %v32 = vld [vmem:[%s0 + $0x20] sm:$0xff]
    %v33 = vld [vmem:[%s0 + $0x28] sm:$0xff]
    %v34 = vld [vmem:[%s0 + $0x30] sm:$0xff]
    %v35 = vld [vmem:[%s0 + $0x38] sm:$0xff]
    %v36 = vld [vmem:[%s0 + $0x40] sm:$0xff]
    %v37 = vld [vmem:[%s0 + $0x48] sm:$0xff]
    %v38 = vld [vmem:[%s0 + $0x50] sm:$0xff]
    %v39 = vld [vmem:[%s0 + $0x58] sm:$0xff]
    %v40 = vld [vmem:[%s0 + $0x60] sm:$0xff]
    %v41 = vld [vmem:[%s0 + $0x68] sm:$0xff]
    %v42 = vld [vmem:[%s0 + $0x70] sm:$0xff]
    %v43 = vld [vmem:[%s0 + $0x78] sm:$0xff]
    %v44 = vld [vmem:[%s2] sm:$0xf]
    %v45 = vld [vmem:[%s2 + $0x4] sm:$0xf]
    %v46 = vld [vmem:[%s2 + $0x8] sm:$0xf]
    %v47 = vld [vmem:[%s2 + $0xc] sm:$0xf]
    %v48 = vld [vmem:[%s2 + $0x10] sm:$0xf]
    %v49 = vld [vmem:[%s2 + $0x14] sm:$0xf]
    %v50 = vld [vmem:[%s2 + $0x18] sm:$0xf]
    %v51 = vld [vmem:[%s2 + $0x1c] sm:$0xf]
    %v52 = vld [vmem:[%s2 + $0x20] sm:$0xf]
    %v53 = vld [vmem:[%s2 + $0x24] sm:$0xf]
    %v54 = vld [vmem:[%s2 + $0x28] sm:$0xf]
    %v55 = vld [vmem:[%s2 + $0x2c] sm:$0xf]
    %v56 = vld [vmem:[%s2 + $0x30] sm:$0xf]
    %v57 = vld [vmem:[%s2 + $0x34] sm:$0xf]
    %v58 = vld [vmem:[%s2 + $0x38] sm:$0xf]
    %v59 = vld [vmem:[%s2 + $0x3c] sm:$0xf]
    %v60 = vld [vmem:[%s2 + $0x40] sm:$0xf]
    %v61 = vld [vmem:[%s2 + $0x44] sm:$0xf]
    %v62 = vld [vmem:[%s2 + $0x48] sm:$0xf]
    %v63 = vld [vmem:[%s2 + $0x4c] sm:$0xf]
    %v64 = vld [vmem:[%s2 + $0x50] sm:$0xf]
    %v65 = vld [vmem:[%s2 + $0x54] sm:$0xf]
    %v66 = vld [vmem:[%s2 + $0x58] sm:$0xf]
    %v67 = vld [vmem:[%s2 + $0x5c] sm:$0xf]
    %v68 = vld [vmem:[%s2 + $0x60] sm:$0xf]
    %v69 = vld [vmem:[%s2 + $0x64] sm:$0xf]
    %v70 = vld [vmem:[%s2 + $0x68] sm:$0xf]
    %v71 = vld [vmem:[%s2 + $0x6c] sm:$0xf]
    %v72 = vld [vmem:[%s2 + $0x70] sm:$0xf]
    %v73 = vld [vmem:[%s2 + $0x74] sm:$0xf]
    %v74 = vld [vmem:[%s2 + $0x78] sm:$0xf]
    %v75 = vld [vmem:[%s2 + $0x7c] sm:$0xf]
    %v76 = vld [vmem:[%s6] sm:$0x1]
    %v77 = vperm.slane %v76, 0
    %v94 = vunpack.c.l.b16 %v28
    %v95 = vunpack.c.h.b16 %v28
    %v96 = vunpack.c.l.b16 %v29
    %v97 = vunpack.c.h.b16 %v29
    %v98 = vunpack.c.l.b16 %v30
    %v99 = vunpack.c.h.b16 %v30
    %v100 = vunpack.c.l.b16 %v31
    %v101 = vunpack.c.h.b16 %v31
    %v102 = vunpack.c.l.b16 %v32
    %v103 = vunpack.c.h.b16 %v32
    %v104 = vunpack.c.l.b16 %v33
    %v105 = vunpack.c.h.b16 %v33
    %v106 = vunpack.c.l.b16 %v34
    %v107 = vunpack.c.h.b16 %v34
    %v108 = vunpack.c.l.b16 %v35
    %v109 = vunpack.c.h.b16 %v35
    %v110 = vunpack.c.l.b16 %v36
    %v111 = vunpack.c.h.b16 %v36
    %v112 = vunpack.c.l.b16 %v37
    %v113 = vunpack.c.h.b16 %v37
    %v114 = vunpack.c.l.b16 %v38
    %v115 = vunpack.c.h.b16 %v38
    %v116 = vunpack.c.l.b16 %v39
    %v117 = vunpack.c.h.b16 %v39
    %v118 = vunpack.c.l.b16 %v40
    %v119 = vunpack.c.h.b16 %v40
    %v120 = vunpack.c.l.b16 %v41
    %v121 = vunpack.c.h.b16 %v41
    %v122 = vunpack.c.l.b16 %v42
    %v123 = vunpack.c.h.b16 %v42
    %v124 = vunpack.c.l.b16 %v43
    %v125 = vunpack.c.h.b16 %v43
    %v126 = vpack.c.b16 %v96, %v94
    %v127 = vpack.c.b16 %v97, %v95
    %v128 = vpack.c.b16 %v100, %v98
    %v129 = vpack.c.b16 %v101, %v99
    %v130 = vpack.c.b16 %v104, %v102
    %v131 = vpack.c.b16 %v105, %v103
    %v132 = vpack.c.b16 %v108, %v106
    %v133 = vpack.c.b16 %v109, %v107
    %v134 = vpack.c.b16 %v112, %v110
    %v135 = vpack.c.b16 %v113, %v111
    %v136 = vpack.c.b16 %v116, %v114
    %v137 = vpack.c.b16 %v117, %v115
    %v138 = vpack.c.b16 %v120, %v118
    %v139 = vpack.c.b16 %v121, %v119
    %v140 = vpack.c.b16 %v124, %v122
    %v141 = vpack.c.b16 %v125, %v123
    %v190 = vunpack.c.l.b16 %v44
    %v191 = vunpack.c.l.b16 %v45
    %v192 = vunpack.c.l.b16 %v46
    %v193 = vunpack.c.l.b16 %v47
    %v194 = vunpack.c.l.b16 %v48
    %v195 = vunpack.c.l.b16 %v49
    %v196 = vunpack.c.l.b16 %v50
    %v197 = vunpack.c.l.b16 %v51
    %v198 = vunpack.c.l.b16 %v52
    %v199 = vunpack.c.l.b16 %v53
    %v200 = vunpack.c.l.b16 %v54
    %v201 = vunpack.c.l.b16 %v55
    %v202 = vunpack.c.l.b16 %v56
    %v203 = vunpack.c.l.b16 %v57
    %v204 = vunpack.c.l.b16 %v58
    %v205 = vunpack.c.l.b16 %v59
    %v206 = vunpack.c.l.b16 %v60
    %v207 = vunpack.c.l.b16 %v61
    %v208 = vunpack.c.l.b16 %v62
    %v209 = vunpack.c.l.b16 %v63
    %v210 = vunpack.c.l.b16 %v64
    %v211 = vunpack.c.l.b16 %v65
    %v212 = vunpack.c.l.b16 %v66
    %v213 = vunpack.c.l.b16 %v67
    %v214 = vunpack.c.l.b16 %v68
    %v215 = vunpack.c.l.b16 %v69
    %v216 = vunpack.c.l.b16 %v70
    %v217 = vunpack.c.l.b16 %v71
    %v218 = vunpack.c.l.b16 %v72
    %v219 = vunpack.c.l.b16 %v73
    %v220 = vunpack.c.l.b16 %v74
    %v221 = vunpack.c.l.b16 %v75
    %v222 = vpack.c.b16 %v191, %v190
    %v223 = vpack.c.b16 %v193, %v192
    %v224 = vpack.c.b16 %v195, %v194
    %v225 = vpack.c.b16 %v197, %v196
    %v226 = vpack.c.b16 %v199, %v198
    %v227 = vpack.c.b16 %v201, %v200
    %v228 = vpack.c.b16 %v203, %v202
    %v229 = vpack.c.b16 %v205, %v204
    %v230 = vpack.c.b16 %v207, %v206
    %v231 = vpack.c.b16 %v209, %v208
    %v232 = vpack.c.b16 %v211, %v210
    %v233 = vpack.c.b16 %v213, %v212
    %v234 = vpack.c.b16 %v215, %v214
    %v235 = vpack.c.b16 %v217, %v216
    %v236 = vpack.c.b16 %v219, %v218
    %v237 = vpack.c.b16 %v221, %v220
    %254 = vmatpush.bf16.msra.mxu0 %v229
    %255 = vmatpush.bf16.msra.mxu0 %v228
    %256 = vmatpush.bf16.msra.mxu0 %v227
    %257 = vmatpush.bf16.msra.mxu0 %v226
    %258 = vmatpush.bf16.msra.mxu0 %v225
    %259 = vmatpush.bf16.msra.mxu0 %v224
    %260 = vmatpush.bf16.msra.mxu0 %v223
    %261 = vmatpush.bf16.msra.mxu0 %v222
    %262 = vmatmul.bf16.gmra.mxu0 %v126
    %v263 = vpop.f32.mrf.mxu0
    %v264 = vadd.f32 %v77, %v263
    %v265 = vpop.f32.mrf.mxu0
    %v266 = vadd.f32 %v77, %v265
    %267 = vmatmul.bf16.gmra.mxu0 %v128
    %v268 = vpop.f32.mrf.mxu0
    %v269 = vadd.f32 %v77, %v268
    %v270 = vpop.f32.mrf.mxu0
    %v271 = vadd.f32 %v77, %v270
    %272 = vmatmul.bf16.gmra.mxu0 %v130
    %v273 = vpop.f32.mrf.mxu0
    %v274 = vadd.f32 %v77, %v273
    %v275 = vpop.f32.mrf.mxu0
    %v276 = vadd.f32 %v77, %v275
    %277 = vmatmul.bf16.gmra.mxu0 %v132
    %v278 = vpop.f32.mrf.mxu0
    %v279 = vadd.f32 %v77, %v278
    %v280 = vpop.f32.mrf.mxu0
    %v281 = vadd.f32 %v77, %v280
    %282 = vmatmul.bf16.gmra.mxu0 %v134
    %v283 = vpop.f32.mrf.mxu0
    %v284 = vadd.f32 %v77, %v283
    %v285 = vpop.f32.mrf.mxu0
    %v286 = vadd.f32 %v77, %v285
    %287 = vmatmul.bf16.gmra.mxu0 %v136
    %v288 = vpop.f32.mrf.mxu0
    %v289 = vadd.f32 %v77, %v288
    %v290 = vpop.f32.mrf.mxu0
    %v291 = vadd.f32 %v77, %v290
    %292 = vmatmul.bf16.gmra.mxu0 %v138
    %v293 = vpop.f32.mrf.mxu0
    %v294 = vadd.f32 %v77, %v293
    %v295 = vpop.f32.mrf.mxu0
    %v296 = vadd.f32 %v77, %v295
    %297 = vmatmul.bf16.gmra.mxu0 %v140
    %v298 = vpop.f32.mrf.mxu0
    %v299 = vadd.f32 %v77, %v298
    %v300 = vpop.f32.mrf.mxu0
    %v301 = vadd.f32 %v77, %v300
    %302 = vdwg.mxu0
    %303 = vmatpush.bf16.msra.mxu0 %v237
    %304 = vmatpush.bf16.msra.mxu0 %v236
    %305 = vmatpush.bf16.msra.mxu0 %v235
    %306 = vmatpush.bf16.msra.mxu0 %v234
    %307 = vmatpush.bf16.msra.mxu0 %v233
    %308 = vmatpush.bf16.msra.mxu0 %v232
    %309 = vmatpush.bf16.msra.mxu0 %v231
    %310 = vmatpush.bf16.msra.mxu0 %v230
    %311 = vmatmul.bf16.gmra.mxu0 %v127
    %v312 = vpop.f32.mrf.mxu0
    %v313 = vadd.f32 %v264, %v312
    %v314 = vpop.f32.mrf.mxu0
    %v315 = vadd.f32 %v266, %v314
    %316 = vmatmul.bf16.gmra.mxu0 %v129
    %v317 = vpop.f32.mrf.mxu0
    %v318 = vadd.f32 %v269, %v317
    %v319 = vpop.f32.mrf.mxu0
    %v320 = vadd.f32 %v271, %v319
    %321 = vmatmul.bf16.gmra.mxu0 %v131
    %v322 = vpop.f32.mrf.mxu0
    %v323 = vadd.f32 %v274, %v322
    %v324 = vpop.f32.mrf.mxu0
    %v325 = vadd.f32 %v276, %v324
    %326 = vmatmul.bf16.gmra.mxu0 %v133
    %v327 = vpop.f32.mrf.mxu0
    %v328 = vadd.f32 %v279, %v327
    %v329 = vpop.f32.mrf.mxu0
    %v330 = vadd.f32 %v281, %v329
    %331 = vmatmul.bf16.gmra.mxu0 %v135
    %v332 = vpop.f32.mrf.mxu0
    %v333 = vadd.f32 %v284, %v332
    %v334 = vpop.f32.mrf.mxu0
    %v335 = vadd.f32 %v286, %v334
    %336 = vmatmul.bf16.gmra.mxu0 %v137
    %v337 = vpop.f32.mrf.mxu0
    %v338 = vadd.f32 %v289, %v337
    %v339 = vpop.f32.mrf.mxu0
    %v340 = vadd.f32 %v291, %v339
    %341 = vmatmul.bf16.gmra.mxu0 %v139
    %v342 = vpop.f32.mrf.mxu0
    %v343 = vadd.f32 %v294, %v342
    %v344 = vpop.f32.mrf.mxu0
    %v345 = vadd.f32 %v296, %v344
    %346 = vmatmul.bf16.gmra.mxu0 %v141
    %v347 = vpop.f32.mrf.mxu0
    %v348 = vadd.f32 %v299, %v347
    %v349 = vpop.f32.mrf.mxu0
    %v350 = vadd.f32 %v301, %v349
    %351 = vdwg.mxu0
    %v352 = vmax.f32 %v313, 0.0
    %v353 = vmax.f32 %v315, 0.0
    %v354 = vmax.f32 %v318, 0.0
    %v355 = vmax.f32 %v320, 0.0
    %v356 = vmax.f32 %v323, 0.0
    %v357 = vmax.f32 %v325, 0.0
    %v358 = vmax.f32 %v328, 0.0
    %v359 = vmax.f32 %v330, 0.0
    %v360 = vmax.f32 %v333, 0.0
    %v361 = vmax.f32 %v335, 0.0
    %v362 = vmax.f32 %v338, 0.0
    %v363 = vmax.f32 %v340, 0.0
    %v364 = vmax.f32 %v343, 0.0
    %v365 = vmax.f32 %v345, 0.0
    %v366 = vmax.f32 %v348, 0.0
    %v367 = vmax.f32 %v350, 0.0
    %vm368 = vcmask 130048
    %369 = vst.msk [vmem:[#allocation2] sm:$0xff] %vm368, %v352
    %371 = vrot.lane.b32.xlu0 %v353, 16
    %v372 = vpop.permute.xlu0 %371
    %vm374 = vcmask 261248
    %375 = vst.msk [vmem:[#allocation2] sm:$0xff] %vm374, %v372
    %377 = vrot.lane.b32.xlu0 %v354, 32
    %v378 = vpop.permute.xlu0 %377
    %vm380 = vcmask 392448
    %381 = vst.msk [vmem:[#allocation2] sm:$0xff] %vm380, %v378
    %383 = vrot.lane.b32.xlu0 %v355, 48
    %v384 = vpop.permute.xlu0 %383
    %vm386 = vcmask 523648
    %387 = vst.msk [vmem:[#allocation2] sm:$0xff] %vm386, %v384
    %389 = vrot.lane.b32.xlu0 %v356, 64
    %v390 = vpop.permute.xlu0 %389
    %vm392 = vcmask 654848
    %393 = vst.msk [vmem:[#allocation2] sm:$0xff] %vm392, %v390
    %395 = vrot.lane.b32.xlu0 %v357, 80
    %v396 = vpop.permute.xlu0 %395
    %vm398 = vcmask 786048
    %399 = vst.msk [vmem:[#allocation2] sm:$0xff] %vm398, %v396
    %401 = vrot.lane.b32.xlu0 %v358, 96
    %v402 = vpop.permute.xlu0 %401
    %vm404 = vcmask 917248
    %405 = vst.msk [vmem:[#allocation2] sm:$0xff] %vm404, %v402
    %407 = vrot.lane.b32.xlu0 %v359, 112
    %v408 = vpop.permute.xlu0 %407
    %vm410 = vcmask 1048448
    %411 = vst.msk [vmem:[#allocation2] sm:$0xff] %vm410, %v408
    %412 = vst.msk [vmem:[#allocation2 + $0x8] sm:$0xff] %vm368, %v360
    %414 = vrot.lane.b32.xlu0 %v361, 16
    %v415 = vpop.permute.xlu0 %414
    %417 = vst.msk [vmem:[#allocation2 + $0x8] sm:$0xff] %vm374, %v415
    %419 = vrot.lane.b32.xlu0 %v362, 32
    %v420 = vpop.permute.xlu0 %419
    %422 = vst.msk [vmem:[#allocation2 + $0x8] sm:$0xff] %vm380, %v420
    %424 = vrot.lane.b32.xlu0 %v363, 48
    %v425 = vpop.permute.xlu0 %424
    %427 = vst.msk [vmem:[#allocation2 + $0x8] sm:$0xff] %vm386, %v425
    %429 = vrot.lane.b32.xlu0 %v364, 64
    %v430 = vpop.permute.xlu0 %429
    %432 = vst.msk [vmem:[#allocation2 + $0x8] sm:$0xff] %vm392, %v430
    %434 = vrot.lane.b32.xlu0 %v365, 80
    %v435 = vpop.permute.xlu0 %434
    %437 = vst.msk [vmem:[#allocation2 + $0x8] sm:$0xff] %vm398, %v435
    %439 = vrot.lane.b32.xlu0 %v366, 96
    %v440 = vpop.permute.xlu0 %439
    %442 = vst.msk [vmem:[#allocation2 + $0x8] sm:$0xff] %vm404, %v440
    %444 = vrot.lane.b32.xlu0 %v367, 112
    %v445 = vpop.permute.xlu0 %444
    %447 = vst.msk [vmem:[#allocation2 + $0x8] sm:$0xff] %vm410, %v445
    %v448 = vld [vmem:[#allocation2] sm:$0xff]
    %v449 = vld [vmem:[#allocation2 + $0x8] sm:$0xff]
    %v450 = vpack.c.bf16 %v448, %v448
    %v451 = vpack.c.bf16 %v449, %v449
    %v452 = vld [vmem:[%s3] sm:$0xf]
    %v453 = vld [vmem:[%s3 + $0x4] sm:$0xf]
    %v454 = vld [vmem:[%s3 + $0x8] sm:$0xf]
    %v455 = vld [vmem:[%s3 + $0xc] sm:$0xf]
    %v456 = vld [vmem:[%s3 + $0x10] sm:$0xf]
    %v457 = vld [vmem:[%s3 + $0x14] sm:$0xf]
    %v458 = vld [vmem:[%s3 + $0x18] sm:$0xf]
    %v459 = vld [vmem:[%s3 + $0x1c] sm:$0xf]
    %v460 = vld [vmem:[%s3 + $0x20] sm:$0xf]
    %v461 = vld [vmem:[%s3 + $0x24] sm:$0xf]
    %v462 = vld [vmem:[%s3 + $0x28] sm:$0xf]
    %v463 = vld [vmem:[%s3 + $0x2c] sm:$0xf]
    %v464 = vld [vmem:[%s3 + $0x30] sm:$0xf]
    %v465 = vld [vmem:[%s3 + $0x34] sm:$0xf]
    %v466 = vld [vmem:[%s3 + $0x38] sm:$0xf]
    %v467 = vld [vmem:[%s3 + $0x3c] sm:$0xf]
    %v468 = vld [vmem:[%s3 + $0x40] sm:$0xf]
    %v469 = vld [vmem:[%s3 + $0x44] sm:$0xf]
    %v470 = vld [vmem:[%s3 + $0x48] sm:$0xf]
    %v471 = vld [vmem:[%s3 + $0x4c] sm:$0xf]
    %v472 = vld [vmem:[%s3 + $0x50] sm:$0xf]
    %v473 = vld [vmem:[%s3 + $0x54] sm:$0xf]
    %v474 = vld [vmem:[%s3 + $0x58] sm:$0xf]
    %v475 = vld [vmem:[%s3 + $0x5c] sm:$0xf]
    %v476 = vld [vmem:[%s3 + $0x60] sm:$0xf]
    %v477 = vld [vmem:[%s3 + $0x64] sm:$0xf]
    %v478 = vld [vmem:[%s3 + $0x68] sm:$0xf]
    %v479 = vld [vmem:[%s3 + $0x6c] sm:$0xf]
    %v480 = vld [vmem:[%s3 + $0x70] sm:$0xf]
    %v481 = vld [vmem:[%s3 + $0x74] sm:$0xf]
    %v482 = vld [vmem:[%s3 + $0x78] sm:$0xf]
    %v483 = vld [vmem:[%s3 + $0x7c] sm:$0xf]
    %v484 = vld [vmem:[%s6 + $0x1] sm:$0x1]
    %v485 = vperm.slane %v484, 0
    %v518 = vunpack.c.l.b16 %v452
    %v519 = vunpack.c.l.b16 %v453
    %v520 = vunpack.c.l.b16 %v454
    %v521 = vunpack.c.l.b16 %v455
    %v522 = vunpack.c.l.b16 %v456
    %v523 = vunpack.c.l.b16 %v457
    %v524 = vunpack.c.l.b16 %v458
    %v525 = vunpack.c.l.b16 %v459
    %v526 = vunpack.c.l.b16 %v460
    %v527 = vunpack.c.l.b16 %v461
    %v528 = vunpack.c.l.b16 %v462
    %v529 = vunpack.c.l.b16 %v463
    %v530 = vunpack.c.l.b16 %v464
    %v531 = vunpack.c.l.b16 %v465
    %v532 = vunpack.c.l.b16 %v466
    %v533 = vunpack.c.l.b16 %v467
    %v534 = vunpack.c.l.b16 %v468
    %v535 = vunpack.c.l.b16 %v469
    %v536 = vunpack.c.l.b16 %v470
    %v537 = vunpack.c.l.b16 %v471
    %v538 = vunpack.c.l.b16 %v472
    %v539 = vunpack.c.l.b16 %v473
    %v540 = vunpack.c.l.b16 %v474
    %v541 = vunpack.c.l.b16 %v475
    %v542 = vunpack.c.l.b16 %v476
    %v543 = vunpack.c.l.b16 %v477
    %v544 = vunpack.c.l.b16 %v478
    %v545 = vunpack.c.l.b16 %v479
    %v546 = vunpack.c.l.b16 %v480
    %v547 = vunpack.c.l.b16 %v481
    %v548 = vunpack.c.l.b16 %v482
    %v549 = vunpack.c.l.b16 %v483
    %v550 = vpack.c.b16 %v519, %v518
    %v551 = vpack.c.b16 %v521, %v520
    %v552 = vpack.c.b16 %v523, %v522
    %v553 = vpack.c.b16 %v525, %v524
    %v554 = vpack.c.b16 %v527, %v526
    %v555 = vpack.c.b16 %v529, %v528
    %v556 = vpack.c.b16 %v531, %v530
    %v557 = vpack.c.b16 %v533, %v532
    %v558 = vpack.c.b16 %v535, %v534
    %v559 = vpack.c.b16 %v537, %v536
    %v560 = vpack.c.b16 %v539, %v538
    %v561 = vpack.c.b16 %v541, %v540
    %v562 = vpack.c.b16 %v543, %v542
    %v563 = vpack.c.b16 %v545, %v544
    %v564 = vpack.c.b16 %v547, %v546
    %v565 = vpack.c.b16 %v549, %v548
    %582 = vmatpush.bf16.msra.mxu0 %v557
    %583 = vmatpush.bf16.msra.mxu0 %v556
    %584 = vmatpush.bf16.msra.mxu0 %v555
    %585 = vmatpush.bf16.msra.mxu0 %v554
    %586 = vmatpush.bf16.msra.mxu0 %v553
    %587 = vmatpush.bf16.msra.mxu0 %v552
    %588 = vmatpush.bf16.msra.mxu0 %v551
    %589 = vmatpush.bf16.msra.mxu0 %v550
    %590 = vmatmul.bf16.gmra.mxu0 %v450
    %v591 = vpop.f32.mrf.mxu0
    %v592 = vadd.f32 %v485, %v591
    %v593 = vpop.f32.mrf.mxu0
    %594 = vdwg.mxu0
    %595 = vmatpush.bf16.msra.mxu0 %v565
    %596 = vmatpush.bf16.msra.mxu0 %v564
    %597 = vmatpush.bf16.msra.mxu0 %v563
    %598 = vmatpush.bf16.msra.mxu0 %v562
    %599 = vmatpush.bf16.msra.mxu0 %v561
    %600 = vmatpush.bf16.msra.mxu0 %v560
    %601 = vmatpush.bf16.msra.mxu0 %v559
    %602 = vmatpush.bf16.msra.mxu0 %v558
    %603 = vmatmul.bf16.gmra.mxu0 %v451
    %v604 = vpop.f32.mrf.mxu0
    %v605 = vadd.f32 %v592, %v604
    %v606 = vpop.f32.mrf.mxu0
    %607 = vdwg.mxu0
    %v608 = vmax.f32 %v605, 0.0
    %vm609 = vcmask 1041408
    %vm610 = vcmask 60418
    %vm611 = vmor %vm610, %vm609
    %612 = vst.msk [vmem:[#allocation3] sm:$0xf] %vm611, 0.0
    %v613 = vld [vmem:[%s1] sm:$0x3]
    %vm614 = vcmask 58368
    %615 = vst.msk [vmem:[#allocation3 + $0x2] sm:$0x3] %vm614, %v613
    %vm616 = vcmask 253952
    %617 = vst.msk [vmem:[#allocation3] sm:$0x1] %vm616, %v608
    %v619 = vrot.slane %v608, 7
    %v620 = vrot.slane %v619, 2
    %621 = vrot.lane.b32.xlu0 %v620, 32
    %v622 = vpop.permute.xlu0 %621
    %vm624 = vcmask 516352
    %625 = vst.msk [vmem:[#allocation3] sm:$0x1] %vm624, %v622
    %626 = vst.sshfl [vmem:[#allocation1] sm:$0xff pattern:$0x73625140] %v608
    %s627 = scalar_lea.vmem [#allocation1], 1
    %v628 = vld [vmem:[%s627] ss:$4 sm:$0xff]
    %629 = vrot.lane.b32.xlu0 %v628, 64
    %v630 = vpop.permute.xlu0 %629
    %vm632 = vcmask 778752
    %633 = vst.msk [vmem:[#allocation3] sm:$0x1] %vm632, %v630
    %634 = vst.sshfl [vmem:[#allocation1] sm:$0xff pattern:$0x73625140] %v608
    %s635 = scalar_lea.vmem [#allocation1], 1
    %v636 = vld [vmem:[%s635] ss:$4 sm:$0xff]
    %v637 = vrot.slane %v636, 7
    %v638 = vrot.slane %v637, 2
    %639 = vrot.lane.b32.xlu0 %v638, 96
    %v640 = vpop.permute.xlu0 %639
    %vm642 = vcmask 1041152
    %643 = vst.msk [vmem:[#allocation3] sm:$0x1] %vm642, %v640
    %644 = vst.sshfl [vmem:[#allocation1] sm:$0xff pattern:$0x73625140] %v608
    %s645 = scalar_lea.vmem [#allocation1], 2
    %v646 = vld [vmem:[%s645] ss:$4 sm:$0xff]
    %648 = vst.msk [vmem:[#allocation3 + $0x1] sm:$0x1] %vm616, %v646
    %649 = vst.sshfl [vmem:[#allocation1] sm:$0xff pattern:$0x73625140] %v608
    %s650 = scalar_lea.vmem [#allocation1], 2
    %v651 = vld [vmem:[%s650] ss:$4 sm:$0xff]
    %v652 = vrot.slane %v651, 7
    %v653 = vrot.slane %v652, 2
    %654 = vrot.lane.b32.xlu0 %v653, 32
    %v655 = vpop.permute.xlu0 %654
    %657 = vst.msk [vmem:[#allocation3 + $0x1] sm:$0x1] %vm624, %v655
    %658 = vst.sshfl [vmem:[#allocation1] sm:$0xff pattern:$0x73625140] %v608
    %s659 = scalar_lea.vmem [#allocation1], 3
    %v660 = vld [vmem:[%s659] ss:$4 sm:$0xff]
    %661 = vrot.lane.b32.xlu0 %v660, 64
    %v662 = vpop.permute.xlu0 %661
    %664 = vst.msk [vmem:[#allocation3 + $0x1] sm:$0x1] %vm632, %v662
    %665 = vst.sshfl [vmem:[#allocation1] sm:$0xff pattern:$0x73625140] %v608
    %s666 = scalar_lea.vmem [#allocation1], 3
    %v667 = vld [vmem:[%s666] ss:$4 sm:$0xff]
    %v668 = vrot.slane %v667, 7
    %v669 = vrot.slane %v668, 2
    %670 = vrot.lane.b32.xlu0 %v669, 96
    %v671 = vpop.permute.xlu0 %670
    %673 = vst.msk [vmem:[#allocation3 + $0x1] sm:$0x1] %vm642, %v671
    %v674 = vld [vmem:[#allocation3] sm:$0xf]
    %676 = vst [vmem:[#allocation1] ss:$4 sm:$0xff] %v674
    %v677 = vld.sshfl [vmem:[#allocation1] sm:$0xff pattern:$0x73625140]
    %v678 = vld.sshfl [vmem:[#allocation1 + $0x8] sm:$0xff pattern:$0x73625140]
    %v681 = vpack.c.bf16 %v677, %v677
    %v682 = vpack.c.bf16 %v678, %v678
    %v683 = vld [vmem:[%s4] sm:$0xff]
    %v684 = vld [vmem:[%s4 + $0x8] sm:$0xff]
    %v685 = vld [vmem:[%s4 + $0x10] sm:$0xff]
    %v686 = vld [vmem:[%s4 + $0x18] sm:$0xff]
    %v687 = vld [vmem:[%s4 + $0x20] sm:$0xff]
    %v688 = vld [vmem:[%s4 + $0x28] sm:$0xff]
    %v689 = vld [vmem:[%s4 + $0x30] sm:$0xff]
    %v690 = vld [vmem:[%s4 + $0x38] sm:$0xff]
    %v691 = vld [vmem:[%s4 + $0x40] sm:$0xff]
    %v692 = vld [vmem:[%s4 + $0x48] sm:$0xff]
    %v693 = vld [vmem:[%s4 + $0x50] sm:$0xff]
    %v694 = vld [vmem:[%s4 + $0x58] sm:$0xff]
    %v695 = vld [vmem:[%s4 + $0x60] sm:$0xff]
    %v696 = vld [vmem:[%s4 + $0x68] sm:$0xff]
    %v697 = vld [vmem:[%s4 + $0x70] sm:$0xff]
    %v698 = vld [vmem:[%s4 + $0x78] sm:$0xff]
    %v699 = vld [vmem:[%s4 + $0x80] sm:$0xff]
    %s700 = scalar_lea.vmem %s6, 2
    %v701 = vld [vmem:[%s700] ss:$4 sm:$0x3]
    %v703 = vperm.slane %v701, 0
    %v704 = vperm.slane %v701, 1
    %v724 = vunpack.c.l.b16 %v683
    %v725 = vunpack.c.h.b16 %v683
    %v726 = vunpack.c.l.b16 %v684
    %v727 = vunpack.c.h.b16 %v684
    %v728 = vunpack.c.l.b16 %v685
    %v729 = vunpack.c.h.b16 %v685
    %v730 = vunpack.c.l.b16 %v686
    %v731 = vunpack.c.h.b16 %v686
    %v732 = vunpack.c.l.b16 %v687
    %v733 = vunpack.c.h.b16 %v687
    %v734 = vunpack.c.l.b16 %v688
    %v735 = vunpack.c.h.b16 %v688
    %v736 = vunpack.c.l.b16 %v689
    %v737 = vunpack.c.h.b16 %v689
    %v738 = vunpack.c.l.b16 %v690
    %v739 = vunpack.c.h.b16 %v690
    %v740 = vunpack.c.l.b16 %v691
    %v741 = vunpack.c.h.b16 %v691
    %v742 = vunpack.c.l.b16 %v692
    %v743 = vunpack.c.h.b16 %v692
    %v744 = vunpack.c.l.b16 %v693
    %v745 = vunpack.c.h.b16 %v693
    %v746 = vunpack.c.l.b16 %v694
    %v747 = vunpack.c.h.b16 %v694
    %v748 = vunpack.c.l.b16 %v695
    %v749 = vunpack.c.h.b16 %v695
    %v750 = vunpack.c.l.b16 %v696
    %v751 = vunpack.c.h.b16 %v696
    %v752 = vunpack.c.l.b16 %v697
    %v753 = vunpack.c.h.b16 %v697
    %v754 = vunpack.c.l.b16 %v698
    %v755 = vunpack.c.h.b16 %v698
    %v756 = vunpack.c.l.b16 %v699
    %v757 = vunpack.c.h.b16 %v699
    %v758 = vpack.c.b16 %v726, %v724
    %v759 = vpack.c.b16 %v727, %v725
    %v760 = vpack.c.b16 %v730, %v728
    %v761 = vpack.c.b16 %v731, %v729
    %v762 = vpack.c.b16 %v734, %v732
    %v763 = vpack.c.b16 %v735, %v733
    %v764 = vpack.c.b16 %v738, %v736
    %v765 = vpack.c.b16 %v739, %v737
    %v766 = vpack.c.b16 %v742, %v740
    %v767 = vpack.c.b16 %v743, %v741
    %v768 = vpack.c.b16 %v746, %v744
    %v769 = vpack.c.b16 %v747, %v745
    %v770 = vpack.c.b16 %v750, %v748
    %v771 = vpack.c.b16 %v751, %v749
    %v772 = vpack.c.b16 %v754, %v752
    %v773 = vpack.c.b16 %v755, %v753
    %v774 = vpack.c.b16 %v756, %v756
    %v775 = vpack.c.b16 %v757, %v757
    %vm792 = vcmask 64512
    %v794 = vsel %vm792, %v682, 0
    %vm796 = vcmask 1043456
    %v798 = vsel %vm796, %v774, 0
    %v801 = vsel %vm796, %v775, 0
    %803 = vmatpush.bf16.msra.mxu0 %v772
    %804 = vmatpush.bf16.msra.mxu0 %v770
    %805 = vmatpush.bf16.msra.mxu0 %v768
    %806 = vmatpush.bf16.msra.mxu0 %v766
    %807 = vmatpush.bf16.msra.mxu0 %v764
    %808 = vmatpush.bf16.msra.mxu0 %v762
    %809 = vmatpush.bf16.msra.mxu0 %v760
    %810 = vmatpush.bf16.msra.mxu0 %v758
    %811 = vmatmul.bf16.gmra.mxu0 %v681
    %v812 = vpop.f32.mrf.mxu0
    %v813 = vadd.f32 %v703, %v812
    %v814 = vpop.f32.mrf.mxu0
    %815 = vdwg.mxu0
    %816 = vmatpush.bf16.msra.mxu0 0
    %817 = vmatpush.bf16.msra.mxu0 0
    %818 = vmatpush.bf16.msra.mxu0 0
    %819 = vmatpush.bf16.msra.mxu0 0
    %820 = vmatpush.bf16.msra.mxu0 0
    %821 = vmatpush.bf16.msra.mxu0 0
    %822 = vmatpush.bf16.msra.mxu0 0
    %823 = vmatpush.bf16.msra.mxu0 %v798
    %824 = vmatmul.bf16.gmra.mxu0 %v794
    %v825 = vpop.f32.mrf.mxu0
    %v826 = vadd.f32 %v813, %v825
    %v827 = vpop.f32.mrf.mxu0
    %828 = vdwg.mxu0
    %829 = vmatpush.bf16.msra.mxu0 %v773
    %830 = vmatpush.bf16.msra.mxu0 %v771
    %831 = vmatpush.bf16.msra.mxu0 %v769
    %832 = vmatpush.bf16.msra.mxu0 %v767
    %833 = vmatpush.bf16.msra.mxu0 %v765
    %834 = vmatpush.bf16.msra.mxu0 %v763
    %835 = vmatpush.bf16.msra.mxu0 %v761
    %836 = vmatpush.bf16.msra.mxu0 %v759
    %837 = vmatmul.bf16.gmra.mxu0 %v681
    %v838 = vpop.f32.mrf.mxu0
    %v839 = vadd.f32 %v704, %v838
    %v840 = vpop.f32.mrf.mxu0
    %841 = vdwg.mxu0
    %842 = vmatpush.bf16.msra.mxu0 0
    %843 = vmatpush.bf16.msra.mxu0 0
    %844 = vmatpush.bf16.msra.mxu0 0
    %845 = vmatpush.bf16.msra.mxu0 0
    %846 = vmatpush.bf16.msra.mxu0 0
    %847 = vmatpush.bf16.msra.mxu0 0
    %848 = vmatpush.bf16.msra.mxu0 0
    %849 = vmatpush.bf16.msra.mxu0 %v801
    %850 = vmatmul.bf16.gmra.mxu0 %v794
    %v851 = vpop.f32.mrf.mxu0
    %v852 = vadd.f32 %v839, %v851
    %v853 = vpop.f32.mrf.mxu0
    %854 = vdwg.mxu0
    %v855 = vmax.f32 %v826, 0.0
    %v856 = vmax.f32 %v852, 0.0
    %v857 = vpack.c.bf16 %v855, %v855
    %v858 = vpack.c.bf16 %v856, %v856
    %v859 = vld [vmem:[%s5] sm:$0xf]
    %v860 = vld [vmem:[%s5 + $0x4] sm:$0xf]
    %v861 = vld [vmem:[%s5 + $0x8] sm:$0xf]
    %v862 = vld [vmem:[%s5 + $0xc] sm:$0xf]
    %v863 = vld [vmem:[%s5 + $0x10] sm:$0xf]
    %v864 = vld [vmem:[%s5 + $0x14] sm:$0xf]
    %v865 = vld [vmem:[%s5 + $0x18] sm:$0xf]
    %v866 = vld [vmem:[%s5 + $0x1c] sm:$0xf]
    %v867 = vld [vmem:[%s5 + $0x20] sm:$0xf]
    %v868 = vld [vmem:[%s5 + $0x24] sm:$0xf]
    %v869 = vld [vmem:[%s5 + $0x28] sm:$0xf]
    %v870 = vld [vmem:[%s5 + $0x2c] sm:$0xf]
    %v871 = vld [vmem:[%s5 + $0x30] sm:$0xf]
    %v872 = vld [vmem:[%s5 + $0x34] sm:$0xf]
    %v873 = vld [vmem:[%s5 + $0x38] sm:$0xf]
    %v874 = vld [vmem:[%s5 + $0x3c] sm:$0xf]
    %v875 = vld [vmem:[%s5 + $0x40] sm:$0xf]
    %v876 = vld [vmem:[%s5 + $0x44] sm:$0xf]
    %v877 = vld [vmem:[%s5 + $0x48] sm:$0xf]
    %v878 = vld [vmem:[%s5 + $0x4c] sm:$0xf]
    %v879 = vld [vmem:[%s5 + $0x50] sm:$0xf]
    %v880 = vld [vmem:[%s5 + $0x54] sm:$0xf]
    %v881 = vld [vmem:[%s5 + $0x58] sm:$0xf]
    %v882 = vld [vmem:[%s5 + $0x5c] sm:$0xf]
    %v883 = vld [vmem:[%s5 + $0x60] sm:$0xf]
    %v884 = vld [vmem:[%s5 + $0x64] sm:$0xf]
    %v885 = vld [vmem:[%s5 + $0x68] sm:$0xf]
    %v886 = vld [vmem:[%s5 + $0x6c] sm:$0xf]
    %v887 = vld [vmem:[%s5 + $0x70] sm:$0xf]
    %v888 = vld [vmem:[%s5 + $0x74] sm:$0xf]
    %v889 = vld [vmem:[%s5 + $0x78] sm:$0xf]
    %v890 = vld [vmem:[%s5 + $0x7c] sm:$0xf]
    %v891 = vld [vmem:[%s6 + $0x3] sm:$0x1]
    %v892 = vperm.slane %v891, 0
    %v925 = vunpack.c.l.b16 %v859
    %v926 = vunpack.c.l.b16 %v860
    %v927 = vunpack.c.l.b16 %v861
    %v928 = vunpack.c.l.b16 %v862
    %v929 = vunpack.c.l.b16 %v863
    %v930 = vunpack.c.l.b16 %v864
    %v931 = vunpack.c.l.b16 %v865
    %v932 = vunpack.c.l.b16 %v866
    %v933 = vunpack.c.l.b16 %v867
    %v934 = vunpack.c.l.b16 %v868
    %v935 = vunpack.c.l.b16 %v869
    %v936 = vunpack.c.l.b16 %v870
    %v937 = vunpack.c.l.b16 %v871
    %v938 = vunpack.c.l.b16 %v872
    %v939 = vunpack.c.l.b16 %v873
    %v940 = vunpack.c.l.b16 %v874
    %v941 = vunpack.c.l.b16 %v875
    %v942 = vunpack.c.l.b16 %v876
    %v943 = vunpack.c.l.b16 %v877
    %v944 = vunpack.c.l.b16 %v878
    %v945 = vunpack.c.l.b16 %v879
    %v946 = vunpack.c.l.b16 %v880
    %v947 = vunpack.c.l.b16 %v881
    %v948 = vunpack.c.l.b16 %v882
    %v949 = vunpack.c.l.b16 %v883
    %v950 = vunpack.c.l.b16 %v884
    %v951 = vunpack.c.l.b16 %v885
    %v952 = vunpack.c.l.b16 %v886
    %v953 = vunpack.c.l.b16 %v887
    %v954 = vunpack.c.l.b16 %v888
    %v955 = vunpack.c.l.b16 %v889
    %v956 = vunpack.c.l.b16 %v890
    %v957 = vpack.c.b16 %v926, %v925
    %v958 = vpack.c.b16 %v928, %v927
    %v959 = vpack.c.b16 %v930, %v929
    %v960 = vpack.c.b16 %v932, %v931
    %v961 = vpack.c.b16 %v934, %v933
    %v962 = vpack.c.b16 %v936, %v935
    %v963 = vpack.c.b16 %v938, %v937
    %v964 = vpack.c.b16 %v940, %v939
    %v965 = vpack.c.b16 %v942, %v941
    %v966 = vpack.c.b16 %v944, %v943
    %v967 = vpack.c.b16 %v946, %v945
    %v968 = vpack.c.b16 %v948, %v947
    %v969 = vpack.c.b16 %v950, %v949
    %v970 = vpack.c.b16 %v952, %v951
    %v971 = vpack.c.b16 %v954, %v953
    %v972 = vpack.c.b16 %v956, %v955
    %989 = vmatpush.bf16.msra.mxu0 %v964
    %990 = vmatpush.bf16.msra.mxu0 %v963
    %991 = vmatpush.bf16.msra.mxu0 %v962
    %992 = vmatpush.bf16.msra.mxu0 %v961
    %993 = vmatpush.bf16.msra.mxu0 %v960
    %994 = vmatpush.bf16.msra.mxu0 %v959
    %995 = vmatpush.bf16.msra.mxu0 %v958
    %996 = vmatpush.bf16.msra.mxu0 %v957
    %997 = vmatmul.bf16.gmra.mxu0 %v857
    %v998 = vpop.f32.mrf.mxu0
    %v999 = vadd.f32 %v892, %v998
    %v1000 = vpop.f32.mrf.mxu0
    %1001 = vdwg.mxu0
    %1002 = vmatpush.bf16.msra.mxu0 %v972
    %1003 = vmatpush.bf16.msra.mxu0 %v971
    %1004 = vmatpush.bf16.msra.mxu0 %v970
    %1005 = vmatpush.bf16.msra.mxu0 %v969
    %1006 = vmatpush.bf16.msra.mxu0 %v968
    %1007 = vmatpush.bf16.msra.mxu0 %v967
    %1008 = vmatpush.bf16.msra.mxu0 %v966
    %1009 = vmatpush.bf16.msra.mxu0 %v965
    %1010 = vmatmul.bf16.gmra.mxu0 %v858
    %v1011 = vpop.f32.mrf.mxu0
    %v1012 = vadd.f32 %v999, %v1011
    %v1013 = vpop.f32.mrf.mxu0
    %1014 = vdwg.mxu0
    %1015 = vst [vmem:[#allocation4] sm:$0x3] %v1012
    // Predicated region
    $region30: #{dqn_forward.1} parent=1 // pred_check
      _
    $region31: #{dqn_forward.1} parent=1 // pred_check_branch
      %1017 = sbr.rel (0) target = $region33
    $region32: #{dqn_forward.1} parent=1 // pred_region
      %1019 = vsyncadd [#allocation5], 0
      %s1021 = sshll.u32 [#allocation4], 4
      %s1022 = int_to_ptr.vmem [resolvable:$true] %s1021
      %s1023 = sshll.u32 %s7, 4
      %s1024 = int_to_ptr.hbm [resolvable:$true] %s1023
      %1026 = dma.vmem_to_hbm [thread:$0]  %s1022, 32, %s1024, [#allocation5]
    $region33: #{dqn_forward.1} parent=1 // pred_fallthru
      _
    // Predicated region
    $region34: #{dqn_forward.1} parent=1 // pred_check
      _
    $region35: #{dqn_forward.1} parent=1 // pred_check_branch
      %1028 = sbr.rel (0) target = $region37
    $region36: #{dqn_forward.1} parent=1 // pred_region
      %1030 = dma.done [#allocation5], 32
    $region37: #{dqn_forward.1} parent=1 // pred_fallthru
      _
    %1031 = vsyncpa [#allocation5], 1

</llo_original>
